<compile_context>
chip_gen: v7x
topology: tpu7x:2x2x1
jax: 0.10.0
libtpu: 0.0.40
codegen_flags: <defaults>
</compile_context>

<pallas_src>
import functools

import jax
import jax.numpy as jnp
from jax.experimental import pallas as pl
from jax.experimental.pallas import tpu as pltpu

_LANES = 128
_BLOCK_ROWS = 4096       # 4096*128*4 B = 2 MiB per buffer
_PALLAS_MIN_N = 64       # at or below this, prefer the fused-XLA add (use_pallas=False)

# ParameterDict insertion order used by forward()'s torch.cat over self.params.values()
_PARAM_ORDER = ("front", "back", "left", "right", "top", "down")


# ---------------- Pallas kernel: offset_verts (the forward hot path) ----------------
def _offset_verts_kernel(verts_ref, deform_ref, out_ref):
    # new_verts = source.verts_packed() + deform_verts  (lane-dense flat view)
    out_ref[...] = verts_ref[...] + deform_ref[...]


def _offset_verts_flat(source_flat, deform_flat):
    rows = source_flat.shape[0]
    block_rows = rows if rows <= _BLOCK_ROWS else _BLOCK_ROWS
    grid = (pl.cdiv(rows, block_rows),)
    return pl.pallas_call(
        _offset_verts_kernel,
        out_shape=jax.ShapeDtypeStruct((rows, _LANES), jnp.float32),
        grid=grid,
        in_specs=[
            pl.BlockSpec((block_rows, _LANES), lambda i: (i, 0)),
            pl.BlockSpec((block_rows, _LANES), lambda i: (i, 0)),
        ],
        out_specs=pl.BlockSpec((block_rows, _LANES), lambda i: (i, 0)),
        # reuse the (temporary) deform buffer for the output: the op is pure HBM traffic,
        # so skip the extra output allocation.
        input_output_aliases={1: 0},
        compiler_params=pltpu.CompilerParams(dimension_semantics=("parallel",)),
    )(source_flat, deform_flat)


# ---------------- glue: source cube mesh vertices (make_cube_mesh verts) ------------
def make_cube_verts(n, start=-0.5, end=0.5):
    # Packed-vertex order follows make_cube_mesh's OrderedDict:
    # (front, right, back, left, top, down) -- exactly as in the PyTorch spec.
    lin = jnp.linspace(start, end, n, dtype=jnp.float32)
    d1, d2 = jnp.meshgrid(lin, lin, indexing="ij")     # torch.meshgrid default is 'ij'
    d3 = jnp.full_like(d1, end) + 1.0 / n              # verbatim from make_cube_mesh
    sides = [
        jnp.stack((+d3, d1, d2), axis=-1),   # front
        jnp.stack((d1, +d3, d2), axis=-1),   # right
        jnp.stack((-d3, d1, d2), axis=-1),   # back
        jnp.stack((d1, -d3, d2), axis=-1),   # left
        jnp.stack((d1, d2, +d3), axis=-1),   # top
        jnp.stack((d1, d2, -d3), axis=-1),   # down
    ]
    return jnp.stack(sides).reshape(-1, 3)             # (6*n*n, 3)


def flatten_lane_dense(x):
    """Flatten and zero-pad to a lane-dense (rows, 128) view (supports any n)."""
    flat = x.reshape(-1)
    pad = (-flat.shape[0]) % _LANES
    if pad:
        flat = jnp.pad(flat, (0, pad))
    return flat.reshape(-1, _LANES)


def default_use_pallas(n):
    """Recommended dispatch: fused XLA add for small meshes, Pallas for large ones."""
    return n > _PALLAS_MIN_N


# ---------------- Cube.forward -------------------------------------------------------
# NOTE: the PyTorch forward concatenates params in ParameterDict insertion order
# (front, back, left, right, top, down) while packed verts are ordered
# (front, right, back, left, top, down); e.g. the 'back' parameter block offsets the
# 'right' face's vertices.  That per-packed-index pairing is the reference module's
# behavior and is reproduced here unchanged.
# TODO(synk): faces (make_cube_faces) rely on an undefined `make_faces` helper and the
# pytorch3d Meshes/TexturesVertex container; forward only offsets vertices, so only the
# offset packed vertex positions are produced here.
@functools.partial(jax.jit, static_argnums=(2, 3))
def cube_forward(params, source_flat, n, use_pallas):
    num_verts = 6 * n * n
    ps = jnp.concatenate([params[k] for k in _PARAM_ORDER], axis=0)        # (6,3,n,n)
    deform = jnp.transpose(ps, (0, 2, 3, 1)).reshape(-1, 3)                # (V,3)
    # concat + permute + reshape (+ pad) is a single XLA loop fusion: one read of the
    # params, one write of deform_flat.
    deform_flat = flatten_lane_dense(deform.astype(jnp.float32))

    if use_pallas:
        new_flat = _offset_verts_flat(source_flat, deform_flat)
    else:
        # small problems: the fused XLA add (3 HBM passes total) beats custom-call dispatch
        new_flat = source_flat + deform_flat

    new_verts = new_flat.reshape(-1)[: num_verts * 3].reshape(num_verts, 3)
    return new_verts, 0


if __name__ == "__main__":
    n = 32                                              # small spatial size (V = 6144)
    key = jax.random.PRNGKey(0)
    keys = jax.random.split(key, len(_PARAM_ORDER))
    # nn.Parameter init in the module is zeros; use deterministic small random values so
    # the offset actually exercises the kernel.
    params = {
        name: 0.01 * jax.random.normal(k, (1, 3, n, n), dtype=jnp.float32)
        for name, k in zip(_PARAM_ORDER, keys)
    }

    source_verts = make_cube_verts(n)                   # (6*n*n, 3)
    source_flat = flatten_lane_dense(source_verts)      # constant, built once at setup

    # Force the Pallas path so the kernel is exercised at this small demo size
    # (default_use_pallas(n) would pick the fused-XLA path for n <= 64).
    new_verts, aux = cube_forward(params, source_flat, n, True)
    new_verts = jax.block_until_ready(new_verts)

    # Fused-XLA fallback path (the recommended branch for small n)
    new_verts_xla, _ = cube_forward(params, source_flat, n, False)
    new_verts_xla = jax.block_until_ready(new_verts_xla)

    # pure-JAX reference check (same ordering as the PyTorch module)
    ps_ref = jnp.concatenate([params[k] for k in _PARAM_ORDER], axis=0)
    deform_ref = jnp.transpose(ps_ref, (0, 2, 3, 1)).reshape(-1, 3)
    expected = source_verts + deform_ref
    assert new_verts.shape == (6 * n * n, 3)
    assert aux == 0
    assert jnp.allclose(new_verts, expected, atol=1e-6), "Pallas path mismatch vs reference"
    assert jnp.allclose(new_verts_xla, expected, atol=1e-6), "XLA path mismatch vs reference"

    print("KERNEL_OK")
</pallas_src>

<mosaic_0001>
module attributes {stable_mosaic.version = 11 : i64} {
  func.func @_offset_verts_kernel(%arg0: i32, %arg1: memref<144x128xf32, #tpu.memory_space<vmem>>, %arg2: memref<144x128xf32, #tpu.memory_space<vmem>>, %arg3: memref<144x128xf32, #tpu.memory_space<vmem>>) attributes {dimension_semantics = [#tpu.dimension_semantics<parallel>], iteration_bounds = array<i64: 1>, scalar_prefetch = 0 : i64, scratch_operands = 0 : i64, tpu.core_type = #tpu.core_type<tc>, window_params = [{transform_indices = @transform_0, window_bounds = array<i64: 144, 128>}, {transform_indices = @transform_1, window_bounds = array<i64: 144, 128>}, {transform_indices = @transform_2, window_bounds = array<i64: 144, 128>}]} {
    %c0 = arith.constant 0 : index
    %c0_0 = arith.constant 0 : index
    %0 = vector.load %arg1[%c0, %c0_0] : memref<144x128xf32, #tpu.memory_space<vmem>>, vector<144x128xf32>
    %c0_1 = arith.constant 0 : index
    %c0_2 = arith.constant 0 : index
    %1 = vector.load %arg2[%c0_1, %c0_2] : memref<144x128xf32, #tpu.memory_space<vmem>>, vector<144x128xf32>
    %2 = arith.addf %0, %1 : vector<144x128xf32>
    %c0_3 = arith.constant 0 : index
    %c0_4 = arith.constant 0 : index
    %3 = vector.load %arg3[%c0_3, %c0_4] : memref<144x128xf32, #tpu.memory_space<vmem>>, vector<144x128xf32>
    tpu.vector_store %arg3[%c0_3, %c0_4], %2 {strides = array<i32>} : memref<144x128xf32, #tpu.memory_space<vmem>>, vector<144x128xf32>,
    return
  }
  func.func @transform_0(%arg0: i32) -> (i32, i32) {
    %c0_i32 = arith.constant 0 : i32
    %c0_i32_0 = arith.constant 0 : i32
    return %arg0, %c0_i32 : i32, i32
  }
  func.func @transform_1(%arg0: i32) -> (i32, i32) {
    %c0_i32 = arith.constant 0 : i32
    %c0_i32_0 = arith.constant 0 : i32
    return %arg0, %c0_i32 : i32, i32
  }
  func.func @transform_2(%arg0: i32) -> (i32, i32) {
    %c0_i32 = arith.constant 0 : i32
    %c0_i32_0 = arith.constant 0 : i32
    return %arg0, %c0_i32 : i32, i32
  }
}

</mosaic_0001>

<llo_original>
// kernel: cube_forward.1
$region0: #{cube_forward.1}
  #allocation0 [shape = 'u32[]', space=smem, size = 0x4, offset = 0x4, fixed_abs, tag = 'smem constant byte address 0x4 - core index']
  #allocation1 [shape = 'u32[144,128]{1,0:T(1,128)}', space=vmem, size = 0x12000, scoped, tag = 'internal scratch']
  %s0 = inlined_call_operand.vmem [shape: f32[144,128], index: 0, kind: input, shape index: {}]
  %s1 = inlined_call_operand.vmem [shape: f32[144,128], index: 1, kind: input, shape index: {}, may-alias: {1,2}]
  %s2 = inlined_call_operand.vmem [shape: f32[144,128], index: 2, kind: output, shape index: {}, may-alias: {1,2}]
  %s3 = sld [smem:[#allocation0]]
  $region18: #{cube_forward.1} parent=0
    _
  %s5 = ssub.s32 1, %s3
  %s6 = scalar_select 0, %s5, %s3
  // Predicated region
  $region2: #{cube_forward.1} parent=0 // pred_check
    _
  $region3: #{cube_forward.1} parent=0 // pred_check_branch
    %8 = sbr.rel (0) target = $region5
  $region4: #{cube_forward.1} parent=0 // pred_region
    _
  $region5: #{cube_forward.1} parent=0 // pred_fallthru
    _
  // Predicated region
  $region6: #{cube_forward.1} parent=0 // pred_check
    _
  $region7: #{cube_forward.1} parent=0 // pred_check_branch
    %10 = sbr.rel (0) target = $region9
  $region8: #{cube_forward.1} parent=0 // pred_region
    _
  $region9: #{cube_forward.1} parent=0 // pred_fallthru
    _
  %v11 = vld [vmem:[%s0] sm:$0xff]
  %v12 = vld [vmem:[%s0 + $0x8] sm:$0xff]
  %v13 = vld [vmem:[%s0 + $0x10] sm:$0xff]
  %v14 = vld [vmem:[%s0 + $0x18] sm:$0xff]
  %v15 = vld [vmem:[%s0 + $0x20] sm:$0xff]
  %v16 = vld [vmem:[%s0 + $0x28] sm:$0xff]
  %v17 = vld [vmem:[%s0 + $0x30] sm:$0xff]
  %v18 = vld [vmem:[%s0 + $0x38] sm:$0xff]
  %v19 = vld [vmem:[%s0 + $0x40] sm:$0xff]
  %v20 = vld [vmem:[%s0 + $0x48] sm:$0xff]
  %v21 = vld [vmem:[%s0 + $0x50] sm:$0xff]
  %v22 = vld [vmem:[%s0 + $0x58] sm:$0xff]
  %v23 = vld [vmem:[%s0 + $0x60] sm:$0xff]
  %v24 = vld [vmem:[%s0 + $0x68] sm:$0xff]
  %v25 = vld [vmem:[%s0 + $0x70] sm:$0xff]
  %v26 = vld [vmem:[%s0 + $0x78] sm:$0xff]
  %v27 = vld [vmem:[%s0 + $0x80] sm:$0xff]
  %v28 = vld [vmem:[%s0 + $0x88] sm:$0xff]
  %v29 = vld [vmem:[%s1] sm:$0xff]
  %v30 = vld [vmem:[%s1 + $0x8] sm:$0xff]
  %v31 = vld [vmem:[%s1 + $0x10] sm:$0xff]
  %v32 = vld [vmem:[%s1 + $0x18] sm:$0xff]
  %v33 = vld [vmem:[%s1 + $0x20] sm:$0xff]
  %v34 = vld [vmem:[%s1 + $0x28] sm:$0xff]
  %v35 = vld [vmem:[%s1 + $0x30] sm:$0xff]
  %v36 = vld [vmem:[%s1 + $0x38] sm:$0xff]
  %v37 = vld [vmem:[%s1 + $0x40] sm:$0xff]
  %v38 = vld [vmem:[%s1 + $0x48] sm:$0xff]
  %v39 = vld [vmem:[%s1 + $0x50] sm:$0xff]
  %v40 = vld [vmem:[%s1 + $0x58] sm:$0xff]
  %v41 = vld [vmem:[%s1 + $0x60] sm:$0xff]
  %v42 = vld [vmem:[%s1 + $0x68] sm:$0xff]
  %v43 = vld [vmem:[%s1 + $0x70] sm:$0xff]
  %v44 = vld [vmem:[%s1 + $0x78] sm:$0xff]
  %v45 = vld [vmem:[%s1 + $0x80] sm:$0xff]
  %v46 = vld [vmem:[%s1 + $0x88] sm:$0xff]
  %v47 = vadd.f32 %v11, %v29
  %v48 = vadd.f32 %v12, %v30
  %v49 = vadd.f32 %v13, %v31
  %v50 = vadd.f32 %v14, %v32
  %v51 = vadd.f32 %v15, %v33
  %v52 = vadd.f32 %v16, %v34
  %v53 = vadd.f32 %v17, %v35
  %v54 = vadd.f32 %v18, %v36
  %v55 = vadd.f32 %v19, %v37
  %v56 = vadd.f32 %v20, %v38
  %v57 = vadd.f32 %v21, %v39
  %v58 = vadd.f32 %v22, %v40
  %v59 = vadd.f32 %v23, %v41
  %v60 = vadd.f32 %v24, %v42
  %v61 = vadd.f32 %v25, %v43
  %v62 = vadd.f32 %v26, %v44
  %v63 = vadd.f32 %v27, %v45
  %v64 = vadd.f32 %v28, %v46
  %65 = vst [vmem:[%s2] sm:$0xff] %v47
  %66 = vst [vmem:[%s2 + $0x8] sm:$0xff] %v48
  %67 = vst [vmem:[%s2 + $0x10] sm:$0xff] %v49
  %68 = vst [vmem:[%s2 + $0x18] sm:$0xff] %v50
  %69 = vst [vmem:[%s2 + $0x20] sm:$0xff] %v51
  %70 = vst [vmem:[%s2 + $0x28] sm:$0xff] %v52
  %71 = vst [vmem:[%s2 + $0x30] sm:$0xff] %v53
  %72 = vst [vmem:[%s2 + $0x38] sm:$0xff] %v54
  %73 = vst [vmem:[%s2 + $0x40] sm:$0xff] %v55
  %74 = vst [vmem:[%s2 + $0x48] sm:$0xff] %v56
  %75 = vst [vmem:[%s2 + $0x50] sm:$0xff] %v57
  %76 = vst [vmem:[%s2 + $0x58] sm:$0xff] %v58
  %77 = vst [vmem:[%s2 + $0x60] sm:$0xff] %v59
  %78 = vst [vmem:[%s2 + $0x68] sm:$0xff] %v60
  %79 = vst [vmem:[%s2 + $0x70] sm:$0xff] %v61
  %80 = vst [vmem:[%s2 + $0x78] sm:$0xff] %v62
  %81 = vst [vmem:[%s2 + $0x80] sm:$0xff] %v63
  %82 = vst [vmem:[%s2 + $0x88] sm:$0xff] %v64
  // Predicated region
  $region10: #{cube_forward.1} parent=0 // pred_check
    _
  $region11: #{cube_forward.1} parent=0 // pred_check_branch
    %84 = sbr.rel (0) target = $region13
  $region12: #{cube_forward.1} parent=0 // pred_region
    _
  $region13: #{cube_forward.1} parent=0 // pred_fallthru
    _
  // Predicated region
  $region14: #{cube_forward.1} parent=0 // pred_check
    _
  $region15: #{cube_forward.1} parent=0 // pred_check_branch
    %86 = sbr.rel (0) target = $region17
  $region16: #{cube_forward.1} parent=0 // pred_region
    _
  $region17: #{cube_forward.1} parent=0 // pred_fallthru
    _

</llo_original>
